<compile_context>
chip_gen: v5e
topology: v5e:2x2
jax: 0.10.0
libtpu: 0.0.40
codegen_flags: <defaults>
</compile_context>

<pallas_src>
import jax
import jax.numpy as jnp
from jax.experimental import pallas as pl
from jax.experimental.pallas import tpu as pltpu


def _round_up(x, n):
    return ((x + n - 1) // n) * n


def disc_kernel(x_ref, m_ref, h_ref,
                w1a_ref, w1b_ref, b1_ref,
                w2_ref, b2_ref, w3_ref, b3_ref,
                out_ref):
    """One (features, TILE_M) column tile of the Discriminator MLP.

    x_ref, m_ref : (L, TM) bf16        h_ref : (L, TM) f32 uniform [0, 1)
    w1a/w1b (F, L), w2 (F, F), w3 (L, F) : bf16 (pre-transposed)
    b1/b2 (F, 1), b3 (L, 1) : f32      out_ref : (L, TM) f32
    """
    x = x_ref[...]                                   # (L, TM) bf16
    m = m_ref[...]                                   # (L, TM) bf16
    h = h_ref[...]                                   # (L, TM) f32

    # mask = m.clone(); mask[h > 0.3] = 0.5
    mask = jnp.where(h > 0.3, 0.5, m).astype(x.dtype)

    # Linear(2L, F) on cat([x, mask], -1)  ==  W1a @ x + W1b @ mask + b1
    h1 = (jnp.dot(w1a_ref[...], x, preferred_element_type=jnp.float32)
          + jnp.dot(w1b_ref[...], mask, preferred_element_type=jnp.float32)
          + b1_ref[...])
    h1 = jnp.maximum(h1, 0.0).astype(x.dtype)        # ReLU -> bf16 for next MXU

    h2 = jnp.dot(w2_ref[...], h1, preferred_element_type=jnp.float32) + b2_ref[...]
    h2 = jnp.maximum(h2, 0.0).astype(x.dtype)        # ReLU -> bf16

    logits = jnp.dot(w3_ref[...], h2, preferred_element_type=jnp.float32) + b3_ref[...]
    out_ref[...] = (1.0 / (1.0 + jnp.exp(-logits))).astype(out_ref.dtype)   # Sigmoid


def make_params(l_seq, n_feature, key):
    """Deterministic synthetic Linear params, stored as (in, out) for y = x @ W + b."""
    ks = jax.random.split(key, 6)

    def lin(kw, kb, fan_in, fan_out):
        bound = 1.0 / jnp.sqrt(jnp.float32(fan_in))
        w = jax.random.uniform(kw, (fan_in, fan_out), jnp.float32, -bound, bound)
        b = jax.random.uniform(kb, (fan_out,), jnp.float32, -bound, bound)
        return w, b

    w1, b1 = lin(ks[0], ks[1], 2 * l_seq, n_feature)
    w2, b2 = lin(ks[2], ks[3], n_feature, n_feature)
    w3, b3 = lin(ks[4], ks[5], n_feature, l_seq)
    return (w1, b1, w2, b2, w3, b3)


def discriminator_forward(x, m, params, key, tile_m=1024):
    """x, m: (B, l_seq, C) float32.  Returns (B, l_seq, C) float32 in [0, 1].

    NOTE: vary `key` per call to reproduce torch.rand_like's fresh-noise-per-step
    behavior.
    """
    B, L, C = x.shape
    w1, b1, w2, b2, w3, b3 = params
    F = w1.shape[1]
    M = B * C

    # TODO(synk): if this runs in a training loop, keep activations persistently
    # in (L, B*C) layout; these transposes are full extra HBM passes outside the
    # kernel.
    xT = jnp.transpose(x, (1, 0, 2)).reshape(L, M)       # (L, M), M on lanes
    mT = jnp.transpose(m, (1, 0, 2)).reshape(L, M)
    hT = jax.random.uniform(key, (L, M), dtype=jnp.float32)   # torch.rand_like

    # Tile the large M dimension along lanes; pad M up to a multiple of the tile.
    tm = min(tile_m, _round_up(M, 128))
    m_pad = _round_up(M, tm)
    if m_pad != M:
        pad = ((0, 0), (0, m_pad - M))
        xT = jnp.pad(xT, pad)
        mT = jnp.pad(mT, pad)
        hT = jnp.pad(hT, pad)

    xT = xT.astype(jnp.bfloat16)
    mT = mT.astype(jnp.bfloat16)

    # Weights pre-transposed for the (features, M) layout; bf16 on the MXU.
    w1aT = jnp.transpose(w1[:L]).astype(jnp.bfloat16)    # (F, L)
    w1bT = jnp.transpose(w1[L:]).astype(jnp.bfloat16)    # (F, L)
    w2T = jnp.transpose(w2).astype(jnp.bfloat16)         # (F, F)
    w3T = jnp.transpose(w3).astype(jnp.bfloat16)         # (L, F)
    b1c = b1.reshape(F, 1).astype(jnp.float32)
    b2c = b2.reshape(F, 1).astype(jnp.float32)
    b3c = b3.reshape(L, 1).astype(jnp.float32)

    grid = (m_pad // tm,)
    col = lambda i: (0, i)     # stream column tiles of the (L, M) arrays
    rep = lambda i: (0, 0)     # small weights/biases stay resident

    flops = 2 * m_pad * (2 * L * F + F * F + F * L)
    bytes_accessed = ((xT.size + mT.size) * 2        # bf16 streams
                      + hT.size * 4                  # f32 noise stream
                      + m_pad * L * 4)               # f32 output

    outT = pl.pallas_call(
        disc_kernel,
        out_shape=jax.ShapeDtypeStruct((L, m_pad), jnp.float32),
        grid=grid,
        in_specs=[
            pl.BlockSpec((L, tm), col),        # x
            pl.BlockSpec((L, tm), col),        # m
            pl.BlockSpec((L, tm), col),        # h (uniform noise)
            pl.BlockSpec((F, L), rep),         # W1[:L]^T
            pl.BlockSpec((F, L), rep),         # W1[L:]^T
            pl.BlockSpec((F, 1), rep),         # b1
            pl.BlockSpec((F, F), rep),         # W2^T
            pl.BlockSpec((F, 1), rep),         # b2
            pl.BlockSpec((L, F), rep),         # W3^T
            pl.BlockSpec((L, 1), rep),         # b3
        ],
        out_specs=pl.BlockSpec((L, tm), col),
        compiler_params=pltpu.CompilerParams(
            dimension_semantics=("parallel",)),
        cost_estimate=pl.CostEstimate(
            flops=int(flops),
            transcendentals=int(m_pad * L),
            bytes_accessed=int(bytes_accessed)),
    )(xT, mT, hT, w1aT, w1bT, b1c, w2T, b2c, w3T, b3c)

    outT = outT[:, :M]                                     # drop padding
    return jnp.transpose(outT.reshape(L, B, C), (1, 0, 2))


def reference_forward(x, m, params, key):
    """Pure-JAX f32 reference (same noise via the same key)."""
    B, L, C = x.shape
    M = B * C
    w1, b1, w2, b2, w3, b3 = params
    xT = jnp.transpose(x, (1, 0, 2)).reshape(L, M)
    mT = jnp.transpose(m, (1, 0, 2)).reshape(L, M)
    h = jax.random.uniform(key, (L, M), dtype=jnp.float32)
    mask = jnp.where(h > 0.3, 0.5, mT)
    inp = jnp.concatenate([xT, mask], axis=0)              # (2L, M)
    h1 = jnp.maximum(w1.T @ inp + b1[:, None], 0.0)
    h2 = jnp.maximum(w2.T @ h1 + b2[:, None], 0.0)
    out = 1.0 / (1.0 + jnp.exp(-(w3.T @ h2 + b3[:, None])))
    return jnp.transpose(out.reshape(L, B, C), (1, 0, 2))


if __name__ == "__main__":
    B, L, C, F = 2, 8, 4, 32   # batch, l_seq, channels, n_feature

    key = jax.random.PRNGKey(0)
    k_x, k_m, k_p, k_h = jax.random.split(key, 4)

    x = jax.random.normal(k_x, (B, L, C), dtype=jnp.float32)
    m = (jax.random.uniform(k_m, (B, L, C)) > 0.5).astype(jnp.float32)
    params = make_params(L, F, k_p)

    out = discriminator_forward(x, m, params, k_h)
    out = jax.block_until_ready(out)

    assert out.shape == (B, L, C), out.shape
    assert bool(jnp.all((out >= 0.0) & (out <= 1.0))), "sigmoid output out of range"

    ref = reference_forward(x, m, params, k_h)
    max_err = float(jnp.max(jnp.abs(out - ref)))
    assert max_err < 5e-2, f"mismatch vs f32 reference: {max_err}"

    print("KERNEL_OK")
</pallas_src>

<mosaic_0001>
module attributes {stable_mosaic.version = 11 : i64} {
  func.func @disc_kernel(%arg0: i32, %arg1: memref<8x128xbf16, #tpu.memory_space<vmem>>, %arg2: memref<8x128xbf16, #tpu.memory_space<vmem>>, %arg3: memref<8x128xf32, #tpu.memory_space<vmem>>, %arg4: memref<32x8xbf16, #tpu.memory_space<vmem>>, %arg5: memref<32x8xbf16, #tpu.memory_space<vmem>>, %arg6: memref<32x1xf32, #tpu.memory_space<vmem>>, %arg7: memref<32x32xbf16, #tpu.memory_space<vmem>>, %arg8: memref<32x1xf32, #tpu.memory_space<vmem>>, %arg9: memref<8x32xbf16, #tpu.memory_space<vmem>>, %arg10: memref<8x1xf32, #tpu.memory_space<vmem>>, %arg11: memref<8x128xf32, #tpu.memory_space<vmem>>) attributes {dimension_semantics = [#tpu.dimension_semantics<parallel>], iteration_bounds = array<i64: 1>, scalar_prefetch = 0 : i64, scratch_operands = 0 : i64, tpu.core_type = #tpu.core_type<tc>, window_params = [{transform_indices = @transform_0, window_bounds = array<i64: 8, 128>}, {transform_indices = @transform_1, window_bounds = array<i64: 8, 128>}, {transform_indices = @transform_2, window_bounds = array<i64: 8, 128>}, {pipeline_mode = #tpu.pipeline_mode<synchronous>, transform_indices = @transform_3, window_bounds = array<i64: 32, 8>}, {pipeline_mode = #tpu.pipeline_mode<synchronous>, transform_indices = @transform_4, window_bounds = array<i64: 32, 8>}, {pipeline_mode = #tpu.pipeline_mode<synchronous>, transform_indices = @transform_5, window_bounds = array<i64: 32, 1>}, {pipeline_mode = #tpu.pipeline_mode<synchronous>, transform_indices = @transform_6, window_bounds = array<i64: 32, 32>}, {pipeline_mode = #tpu.pipeline_mode<synchronous>, transform_indices = @transform_7, window_bounds = array<i64: 32, 1>}, {pipeline_mode = #tpu.pipeline_mode<synchronous>, transform_indices = @transform_8, window_bounds = array<i64: 8, 32>}, {pipeline_mode = #tpu.pipeline_mode<synchronous>, transform_indices = @transform_9, window_bounds = array<i64: 8, 1>}, {transform_indices = @transform_10, window_bounds = array<i64: 8, 128>}]} {
    %c0 = arith.constant 0 : index
    %c0_0 = arith.constant 0 : index
    %0 = vector.load %arg1[%c0, %c0_0] : memref<8x128xbf16, #tpu.memory_space<vmem>>, vector<8x128xbf16>
    %c0_1 = arith.constant 0 : index
    %c0_2 = arith.constant 0 : index
    %1 = vector.load %arg2[%c0_1, %c0_2] : memref<8x128xbf16, #tpu.memory_space<vmem>>, vector<8x128xbf16>
    %c0_3 = arith.constant 0 : index
    %c0_4 = arith.constant 0 : index
    %2 = vector.load %arg3[%c0_3, %c0_4] : memref<8x128xf32, #tpu.memory_space<vmem>>, vector<8x128xf32>
    %cst = arith.constant 3.000000e-01 : f32
    %3 = vector.broadcast %cst : f32 to vector<8x128xf32>
    %4 = arith.cmpf ogt, %2, %3 : vector<8x128xf32>
    %cst_5 = arith.constant 5.000000e-01 : f32
    %5 = arith.truncf %cst_5 : f32 to bf16
    %6 = vector.broadcast %5 : bf16 to vector<8x128xbf16>
    %7 = arith.select %4, %6, %1 : vector<8x128xi1>, vector<8x128xbf16>
    %c0_6 = arith.constant 0 : index
    %c0_7 = arith.constant 0 : index
    %8 = vector.load %arg4[%c0_6, %c0_7] : memref<32x8xbf16, #tpu.memory_space<vmem>>, vector<32x8xbf16>
    %cst_8 = arith.constant dense<0.000000e+00> : vector<32x128xf32>
    %9 = tpu.matmul %8, %0, %cst_8 {dimension_numbers = #tpu.dot_dimension_numbers<[1], [0], [0], [1], [0, 0, 1, 1], [], []>} : vector<32x8xbf16>, vector<8x128xbf16>, vector<32x128xf32> -> vector<32x128xf32>
    %c0_9 = arith.constant 0 : index
    %c0_10 = arith.constant 0 : index
    %10 = vector.load %arg5[%c0_9, %c0_10] : memref<32x8xbf16, #tpu.memory_space<vmem>>, vector<32x8xbf16>
    %cst_11 = arith.constant dense<0.000000e+00> : vector<32x128xf32>
    %11 = tpu.matmul %10, %7, %cst_11 {dimension_numbers = #tpu.dot_dimension_numbers<[1], [0], [0], [1], [0, 0, 1, 1], [], []>} : vector<32x8xbf16>, vector<8x128xbf16>, vector<32x128xf32> -> vector<32x128xf32>
    %12 = arith.addf %9, %11 : vector<32x128xf32>
    %c0_12 = arith.constant 0 : index
    %c0_13 = arith.constant 0 : index
    %13 = vector.load %arg6[%c0_12, %c0_13] : memref<32x1xf32, #tpu.memory_space<vmem>>, vector<32x1xf32>
    %14 = vector.broadcast %13 : vector<32x1xf32> to vector<32x128xf32>
    %15 = arith.addf %12, %14 : vector<32x128xf32>
    %cst_14 = arith.constant 0.000000e+00 : f32
    %16 = vector.broadcast %cst_14 : f32 to vector<32x128xf32>
    %17 = arith.maximumf %15, %16 : vector<32x128xf32>
    %18 = arith.truncf %17 : vector<32x128xf32> to vector<32x128xbf16>
    %c0_15 = arith.constant 0 : index
    %c0_16 = arith.constant 0 : index
    %19 = vector.load %arg7[%c0_15, %c0_16] : memref<32x32xbf16, #tpu.memory_space<vmem>>, vector<32x32xbf16>
    %cst_17 = arith.constant dense<0.000000e+00> : vector<32x128xf32>
    %20 = tpu.matmul %19, %18, %cst_17 {dimension_numbers = #tpu.dot_dimension_numbers<[1], [0], [0], [1], [0, 0, 1, 1], [], []>} : vector<32x32xbf16>, vector<32x128xbf16>, vector<32x128xf32> -> vector<32x128xf32>
    %c0_18 = arith.constant 0 : index
    %c0_19 = arith.constant 0 : index
    %21 = vector.load %arg8[%c0_18, %c0_19] : memref<32x1xf32, #tpu.memory_space<vmem>>, vector<32x1xf32>
    %22 = vector.broadcast %21 : vector<32x1xf32> to vector<32x128xf32>
    %23 = arith.addf %20, %22 : vector<32x128xf32>
    %cst_20 = arith.constant 0.000000e+00 : f32
    %24 = vector.broadcast %cst_20 : f32 to vector<32x128xf32>
    %25 = arith.maximumf %23, %24 : vector<32x128xf32>
    %26 = arith.truncf %25 : vector<32x128xf32> to vector<32x128xbf16>
    %c0_21 = arith.constant 0 : index
    %c0_22 = arith.constant 0 : index
    %27 = vector.load %arg9[%c0_21, %c0_22] : memref<8x32xbf16, #tpu.memory_space<vmem>>, vector<8x32xbf16>
    %cst_23 = arith.constant dense<0.000000e+00> : vector<8x128xf32>
    %28 = tpu.matmul %27, %26, %cst_23 {dimension_numbers = #tpu.dot_dimension_numbers<[1], [0], [0], [1], [0, 0, 1, 1], [], []>} : vector<8x32xbf16>, vector<32x128xbf16>, vector<8x128xf32> -> vector<8x128xf32>
    %c0_24 = arith.constant 0 : index
    %c0_25 = arith.constant 0 : index
    %29 = vector.load %arg10[%c0_24, %c0_25] : memref<8x1xf32, #tpu.memory_space<vmem>>, vector<8x1xf32>
    %30 = vector.broadcast %29 : vector<8x1xf32> to vector<8x128xf32>
    %31 = arith.addf %28, %30 : vector<8x128xf32>
    %cst_26 = arith.constant 0.000000e+00 : f32
    %32 = vector.broadcast %cst_26 : f32 to vector<8x128xf32>
    %33 = arith.subf %32, %31 : vector<8x128xf32>
    %34 = math.exp %33 : vector<8x128xf32>
    %cst_27 = arith.constant 1.000000e+00 : f32
    %35 = vector.broadcast %cst_27 : f32 to vector<8x128xf32>
    %36 = arith.addf %35, %34 : vector<8x128xf32>
    %cst_28 = arith.constant 1.000000e+00 : f32
    %37 = vector.broadcast %cst_28 : f32 to vector<8x128xf32>
    %38 = arith.divf %37, %36 : vector<8x128xf32>
    %c0_29 = arith.constant 0 : index
    %c0_30 = arith.constant 0 : index
    %39 = vector.load %arg11[%c0_29, %c0_30] : memref<8x128xf32, #tpu.memory_space<vmem>>, vector<8x128xf32>
    tpu.vector_store %arg11[%c0_29, %c0_30], %38 {strides = array<i32>} : memref<8x128xf32, #tpu.memory_space<vmem>>, vector<8x128xf32>,
    return
  }
  func.func @transform_0(%arg0: i32) -> (i32, i32) {
    %c0_i32 = arith.constant 0 : i32
    %c0_i32_0 = arith.constant 0 : i32
    return %c0_i32, %arg0 : i32, i32
  }
  func.func @transform_1(%arg0: i32) -> (i32, i32) {
    %c0_i32 = arith.constant 0 : i32
    %c0_i32_0 = arith.constant 0 : i32
    return %c0_i32, %arg0 : i32, i32
  }
  func.func @transform_2(%arg0: i32) -> (i32, i32) {
    %c0_i32 = arith.constant 0 : i32
    %c0_i32_0 = arith.constant 0 : i32
    return %c0_i32, %arg0 : i32, i32
  }
  func.func @transform_3(%arg0: i32) -> (i32, i32) {
    %c0_i32 = arith.constant 0 : i32
    %c0_i32_0 = arith.constant 0 : i32
    %c0_i32_1 = arith.constant 0 : i32
    return %c0_i32, %c0_i32_0 : i32, i32
  }
  func.func @transform_4(%arg0: i32) -> (i32, i32) {
    %c0_i32 = arith.constant 0 : i32
    %c0_i32_0 = arith.constant 0 : i32
    %c0_i32_1 = arith.constant 0 : i32
    return %c0_i32, %c0_i32_0 : i32, i32
  }
  func.func @transform_5(%arg0: i32) -> (i32, i32) {
    %c0_i32 = arith.constant 0 : i32
    %c0_i32_0 = arith.constant 0 : i32
    %c0_i32_1 = arith.constant 0 : i32
    return %c0_i32, %c0_i32_0 : i32, i32
  }
  func.func @transform_6(%arg0: i32) -> (i32, i32) {
    %c0_i32 = arith.constant 0 : i32
    %c0_i32_0 = arith.constant 0 : i32
    %c0_i32_1 = arith.constant 0 : i32
    return %c0_i32, %c0_i32_0 : i32, i32
  }
  func.func @transform_7(%arg0: i32) -> (i32, i32) {
    %c0_i32 = arith.constant 0 : i32
    %c0_i32_0 = arith.constant 0 : i32
    %c0_i32_1 = arith.constant 0 : i32
    return %c0_i32, %c0_i32_0 : i32, i32
  }
  func.func @transform_8(%arg0: i32) -> (i32, i32) {
    %c0_i32 = arith.constant 0 : i32
    %c0_i32_0 = arith.constant 0 : i32
    %c0_i32_1 = arith.constant 0 : i32
    return %c0_i32, %c0_i32_0 : i32, i32
  }
  func.func @transform_9(%arg0: i32) -> (i32, i32) {
    %c0_i32 = arith.constant 0 : i32
    %c0_i32_0 = arith.constant 0 : i32
    %c0_i32_1 = arith.constant 0 : i32
    return %c0_i32, %c0_i32_0 : i32, i32
  }
  func.func @transform_10(%arg0: i32) -> (i32, i32) {
    %c0_i32 = arith.constant 0 : i32
    %c0_i32_0 = arith.constant 0 : i32
    return %c0_i32, %arg0 : i32, i32
  }
}

</mosaic_0001>

<llo_original>
// kernel: tpu_custom_call.1
$region0: #{tpu_custom_call.1}
  #allocation0 [shape = 'u32[]', space=smem, size = 0x4, offset = 0x4, fixed_abs, tag = 'smem constant byte address 0x4 - core index']
  #allocation1 [shape = 'u32[72,128]{1,0:T(1,128)}', space=vmem, size = 0x9000, scoped, tag = 'internal scratch']
  %s0 = inlined_call_operand.vmem [shape: bf16[8,128], index: 0, kind: input, shape index: {}]
  %s1 = inlined_call_operand.vmem [shape: bf16[8,128], index: 1, kind: input, shape index: {}]
  %s2 = inlined_call_operand.vmem [shape: f32[8,128], index: 2, kind: input, shape index: {}]
  %s3 = inlined_call_operand.vmem [shape: bf16[32,8], index: 3, kind: input, shape index: {}]
  %s4 = inlined_call_operand.vmem [shape: bf16[32,8], index: 4, kind: input, shape index: {}]
  %s5 = inlined_call_operand.vmem [shape: f32[32,1], index: 5, kind: input, shape index: {}]
  %s6 = inlined_call_operand.vmem [shape: bf16[32,32], index: 6, kind: input, shape index: {}]
  %s7 = inlined_call_operand.vmem [shape: f32[32,1], index: 7, kind: input, shape index: {}]
  %s8 = inlined_call_operand.vmem [shape: bf16[8,32], index: 8, kind: input, shape index: {}]
  %s9 = inlined_call_operand.vmem [shape: f32[8,1], index: 9, kind: input, shape index: {}]
  %s10 = inlined_call_operand.hbm [shape: f32[8,128], index: 10, kind: output, shape index: {}]
  %s11 = sld [smem:[#allocation0]]
  $region50: #{tpu_custom_call.1} parent=0
    _
  %s13 = ssub.s32 1, %s11
  %s14 = scalar_select 0, %s13, %s11
  $region1: #{tpu_custom_call.1} parent=0
    #allocation2 [shape = 'u8[4096]{0}', space=vmem, size = 0x1000, scoped, tag = 'output window, operand 0, single buffered']
    #allocation3 [shape = 's32[1]{0}', space=sflag, size = 0x4, scoped, tag = 'scoped memory for tpu_custom_call.1']
    %15 = vsyncpa [#allocation3], 0
    // Predicated region
    $region2: #{tpu_custom_call.1} parent=1 // pred_check
      _
    $region3: #{tpu_custom_call.1} parent=1 // pred_check_branch
      %17 = sbr.rel (0) target = $region5
    $region4: #{tpu_custom_call.1} parent=1 // pred_region
      _
    $region5: #{tpu_custom_call.1} parent=1 // pred_fallthru
      _
    // Predicated region
    $region6: #{tpu_custom_call.1} parent=1 // pred_check
      _
    $region7: #{tpu_custom_call.1} parent=1 // pred_check_branch
      %19 = sbr.rel (0) target = $region9
    $region8: #{tpu_custom_call.1} parent=1 // pred_region
      _
    $region9: #{tpu_custom_call.1} parent=1 // pred_fallthru
      _
    // Predicated region
    $region10: #{tpu_custom_call.1} parent=1 // pred_check
      _
    $region11: #{tpu_custom_call.1} parent=1 // pred_check_branch
      %21 = sbr.rel (0) target = $region13
    $region12: #{tpu_custom_call.1} parent=1 // pred_region
      _
    $region13: #{tpu_custom_call.1} parent=1 // pred_fallthru
      _
    // Predicated region
    $region14: #{tpu_custom_call.1} parent=1 // pred_check
      _
    $region15: #{tpu_custom_call.1} parent=1 // pred_check_branch
      %23 = sbr.rel (0) target = $region17
    $region16: #{tpu_custom_call.1} parent=1 // pred_region
      _
    $region17: #{tpu_custom_call.1} parent=1 // pred_fallthru
      _
    // Predicated region
    $region18: #{tpu_custom_call.1} parent=1 // pred_check
      _
    $region19: #{tpu_custom_call.1} parent=1 // pred_check_branch
      %25 = sbr.rel (0) target = $region21
    $region20: #{tpu_custom_call.1} parent=1 // pred_region
      _
    $region21: #{tpu_custom_call.1} parent=1 // pred_fallthru
      _
    // Predicated region
    $region22: #{tpu_custom_call.1} parent=1 // pred_check
      _
    $region23: #{tpu_custom_call.1} parent=1 // pred_check_branch
      %27 = sbr.rel (0) target = $region25
    $region24: #{tpu_custom_call.1} parent=1 // pred_region
      _
    $region25: #{tpu_custom_call.1} parent=1 // pred_fallthru
      _
    // Predicated region
    $region26: #{tpu_custom_call.1} parent=1 // pred_check
      _
    $region27: #{tpu_custom_call.1} parent=1 // pred_check_branch
      %29 = sbr.rel (0) target = $region29
    $region28: #{tpu_custom_call.1} parent=1 // pred_region
      _
    $region29: #{tpu_custom_call.1} parent=1 // pred_fallthru
      _
    // Predicated region
    $region30: #{tpu_custom_call.1} parent=1 // pred_check
      _
    $region31: #{tpu_custom_call.1} parent=1 // pred_check_branch
      %31 = sbr.rel (0) target = $region33
    $region32: #{tpu_custom_call.1} parent=1 // pred_region
      _
    $region33: #{tpu_custom_call.1} parent=1 // pred_fallthru
      _
    // Predicated region
    $region34: #{tpu_custom_call.1} parent=1 // pred_check
      _
    $region35: #{tpu_custom_call.1} parent=1 // pred_check_branch
      %33 = sbr.rel (0) target = $region37
    $region36: #{tpu_custom_call.1} parent=1 // pred_region
      _
    $region37: #{tpu_custom_call.1} parent=1 // pred_fallthru
      _
    // Predicated region
    $region38: #{tpu_custom_call.1} parent=1 // pred_check
      _
    $region39: #{tpu_custom_call.1} parent=1 // pred_check_branch
      %35 = sbr.rel (0) target = $region41
    $region40: #{tpu_custom_call.1} parent=1 // pred_region
      _
    $region41: #{tpu_custom_call.1} parent=1 // pred_fallthru
      _
    %v38 = vld [vmem:[%s0] sm:$0xf]
    %v39 = vld [vmem:[%s1] sm:$0xf]
    %v40 = vld [vmem:[%s2] sm:$0xff]
    %vm41 = vcmp.gt.f32.partialorder %v40, 0.3
    %vm42 = vmpackc.low %vm41, %vm41
    %v43 = vsel %vm42, 1056980736, %v39
    %v44 = vld [vmem:[%s3] sm:$0xf]
    %v45 = vld [vmem:[%s3 + $0x4] sm:$0xf]
    %v46 = vld [vmem:[%s3 + $0x8] sm:$0xf]
    %v47 = vld [vmem:[%s3 + $0xc] sm:$0xf]
    %v48 = vld [vmem:[%s4] sm:$0xf]
    %v49 = vld [vmem:[%s4 + $0x4] sm:$0xf]
    %v50 = vld [vmem:[%s4 + $0x8] sm:$0xf]
    %v51 = vld [vmem:[%s4 + $0xc] sm:$0xf]
    %v56 = vunpack.c.l.b16 %v48
    %v57 = vunpack.c.l.b16 %v49
    %v58 = vunpack.c.l.b16 %v50
    %v59 = vunpack.c.l.b16 %v51
    %v60 = vpack.c.b16 %v57, %v56
    %v61 = vpack.c.b16 %v59, %v58
    %vm62 = vcmask 64512
    %v64 = vsel %vm62, %v60, 0
    %v67 = vsel %vm62, %v61, 0
    %vm69 = vcmask 1043456
    %v71 = vsel %vm69, %v43, 0
    %73 = vmatpush.bf16.msra.mxu0 0
    %74 = vmatpush.bf16.msra.mxu0 0
    %75 = vmatpush.bf16.msra.mxu0 0
    %76 = vmatpush.bf16.msra.mxu0 0
    %77 = vmatpush.bf16.msra.mxu0 0
    %78 = vmatpush.bf16.msra.mxu0 0
    %79 = vmatpush.bf16.msra.mxu0 0
    %80 = vmatpush.bf16.msra.mxu0 %v71
    %81 = vmatmul.bf16.gmra.mxu0 %v64
    %v82 = vpop.f32.mrf.mxu0
    %v83 = vadd.f32 0.0, %v82
    %v84 = vpop.f32.mrf.mxu0
    %v85 = vadd.f32 0.0, %v84
    %86 = vmatmul.bf16.gmra.mxu0 %v67
    %v87 = vpop.f32.mrf.mxu0
    %v88 = vadd.f32 0.0, %v87
    %v89 = vpop.f32.mrf.mxu0
    %v90 = vadd.f32 0.0, %v89
    %91 = vdwg.mxu0
    %v96 = vunpack.c.l.b16 %v44
    %v97 = vunpack.c.l.b16 %v45
    %v98 = vunpack.c.l.b16 %v46
    %v99 = vunpack.c.l.b16 %v47
    %v100 = vpack.c.b16 %v97, %v96
    %v101 = vpack.c.b16 %v99, %v98
    %v103 = vsel %vm62, %v100, 0
    %v106 = vsel %vm62, %v101, 0
    %v109 = vsel %vm69, %v38, 0
    %111 = vmatpush.bf16.msra.mxu0 0
    %112 = vmatpush.bf16.msra.mxu0 0
    %113 = vmatpush.bf16.msra.mxu0 0
    %114 = vmatpush.bf16.msra.mxu0 0
    %115 = vmatpush.bf16.msra.mxu0 0
    %116 = vmatpush.bf16.msra.mxu0 0
    %117 = vmatpush.bf16.msra.mxu0 0
    %118 = vmatpush.bf16.msra.mxu0 %v109
    %119 = vmatmul.bf16.gmra.mxu0 %v103
    %v120 = vpop.f32.mrf.mxu0
    %v121 = vadd.f32 %v83, %v120
    %v122 = vpop.f32.mrf.mxu0
    %v123 = vadd.f32 %v85, %v122
    %124 = vmatmul.bf16.gmra.mxu0 %v106
    %v125 = vpop.f32.mrf.mxu0
    %v126 = vadd.f32 %v88, %v125
    %v127 = vpop.f32.mrf.mxu0
    %v128 = vadd.f32 %v90, %v127
    %129 = vdwg.mxu0
    %v130 = vld [vmem:[%s5] sm:$0xff]
    %v131 = vld [vmem:[%s5 + $0x8] sm:$0xff]
    %v132 = vld [vmem:[%s5 + $0x10] sm:$0xff]
    %v133 = vld [vmem:[%s5 + $0x18] sm:$0xff]
    %135 = vset.pattern.permute.xlu0 0
    %136 = vperm.xlu0 %135, %v130
    %v137 = vpop.permute.xlu0 %136
    %140 = vset.pattern.permute.xlu0 0
    %141 = vperm.xlu0 %140, %v131
    %v142 = vpop.permute.xlu0 %141
    %145 = vset.pattern.permute.xlu0 0
    %146 = vperm.xlu0 %145, %v132
    %v147 = vpop.permute.xlu0 %146
    %150 = vset.pattern.permute.xlu0 0
    %151 = vperm.xlu0 %150, %v133
    %v152 = vpop.permute.xlu0 %151
    %v154 = vadd.f32 %v121, %v137
    %v155 = vadd.f32 %v123, %v142
    %v156 = vadd.f32 %v126, %v147
    %v157 = vadd.f32 %v128, %v152
    %v158 = vmax.f32 %v154, 0.0
    %v159 = vmax.f32 %v155, 0.0
    %v160 = vmax.f32 %v156, 0.0
    %v161 = vmax.f32 %v157, 0.0
    %v162 = vpack.c.bf16 %v159, %v158
    %v163 = vpack.c.bf16 %v161, %v160
    %v164 = vld [vmem:[%s6] sm:$0xf]
    %v165 = vld [vmem:[%s6 + $0x4] sm:$0xf]
    %v166 = vld [vmem:[%s6 + $0x8] sm:$0xf]
    %v167 = vld [vmem:[%s6 + $0xc] sm:$0xf]
    %v168 = vld [vmem:[%s7] sm:$0xff]
    %v169 = vld [vmem:[%s7 + $0x8] sm:$0xff]
    %v170 = vld [vmem:[%s7 + $0x10] sm:$0xff]
    %v171 = vld [vmem:[%s7 + $0x18] sm:$0xff]
    %173 = vset.pattern.permute.xlu0 0
    %174 = vperm.xlu0 %173, %v168
    %v175 = vpop.permute.xlu0 %174
    %178 = vset.pattern.permute.xlu0 0
    %179 = vperm.xlu0 %178, %v169
    %v180 = vpop.permute.xlu0 %179
    %183 = vset.pattern.permute.xlu0 0
    %184 = vperm.xlu0 %183, %v170
    %v185 = vpop.permute.xlu0 %184
    %188 = vset.pattern.permute.xlu0 0
    %189 = vperm.xlu0 %188, %v171
    %v190 = vpop.permute.xlu0 %189
    %v196 = vunpack.c.l.b16 %v164
    %v197 = vunpack.c.l.b16 %v165
    %v198 = vunpack.c.l.b16 %v166
    %v199 = vunpack.c.l.b16 %v167
    %v200 = vpack.c.b16 %v197, %v196
    %v201 = vpack.c.b16 %v199, %v198
    %vm202 = vcmask 261120
    %v204 = vsel %vm202, %v200, 0
    %v207 = vsel %vm202, %v201, 0
    %209 = vmatpush.bf16.msra.mxu0 0
    %210 = vmatpush.bf16.msra.mxu0 0
    %211 = vmatpush.bf16.msra.mxu0 0
    %212 = vmatpush.bf16.msra.mxu0 0
    %213 = vmatpush.bf16.msra.mxu0 0
    %214 = vmatpush.bf16.msra.mxu0 0
    %215 = vmatpush.bf16.msra.mxu0 %v163
    %216 = vmatpush.bf16.msra.mxu0 %v162
    %217 = vmatmul.bf16.gmra.mxu0 %v204
    %v218 = vpop.f32.mrf.mxu0
    %v219 = vadd.f32 %v175, %v218
    %v220 = vpop.f32.mrf.mxu0
    %v221 = vadd.f32 %v180, %v220
    %222 = vmatmul.bf16.gmra.mxu0 %v207
    %v223 = vpop.f32.mrf.mxu0
    %v224 = vadd.f32 %v185, %v223
    %v225 = vpop.f32.mrf.mxu0
    %v226 = vadd.f32 %v190, %v225
    %227 = vdwg.mxu0
    %v228 = vmax.f32 %v219, 0.0
    %v229 = vmax.f32 %v221, 0.0
    %v230 = vmax.f32 %v224, 0.0
    %v231 = vmax.f32 %v226, 0.0
    %v232 = vpack.c.bf16 %v229, %v228
    %v233 = vpack.c.bf16 %v231, %v230
    %v234 = vld [vmem:[%s8] sm:$0xf]
    %v235 = vld [vmem:[%s9] sm:$0xff]
    %237 = vset.pattern.permute.xlu0 0
    %238 = vperm.xlu0 %237, %v235
    %v239 = vpop.permute.xlu0 %238
    %v242 = vsel %vm202, %v234, 0
    %244 = vmatpush.bf16.msra.mxu0 0
    %245 = vmatpush.bf16.msra.mxu0 0
    %246 = vmatpush.bf16.msra.mxu0 0
    %247 = vmatpush.bf16.msra.mxu0 0
    %248 = vmatpush.bf16.msra.mxu0 0
    %249 = vmatpush.bf16.msra.mxu0 0
    %250 = vmatpush.bf16.msra.mxu0 %v233
    %251 = vmatpush.bf16.msra.mxu0 %v232
    %252 = vmatmul.bf16.gmra.mxu0 %v242
    %v253 = vpop.f32.mrf.mxu0
    %v254 = vadd.f32 %v239, %v253
    %v255 = vpop.f32.mrf.mxu0
    %256 = vdwg.mxu0
    %v257 = vsub.f32 0.0, %v254
    %v258 = vmul.f32 %v257, 1.442695
    %v259 = vpow.pop %v258
    %v260 = vadd.f32 %v259, 1.0
    %v261 = vrcp.pop %v260
    %v262 = vmul.f32 %v260, %v261
    %v263 = vsub.f32 1.0, %v262
    %v264 = vmul.f32 %v261, %v263
    %v265 = vadd.f32 %v261, %v264
    %vm266 = vweird.f32 %v260
    %vm267 = vweird.f32 %v261
    %vm268 = vmor %vm266, %vm267
    %v269 = vsel %vm268, %v261, %v265
    %v270 = vand.u32 2147483647, %v260
    %vm271 = vcmp.eq.f32.partialorder %v270, 8.507059e+37
    %v272 = vand.u32 %v260, 2147483648
    %v273 = vor.u32 1.1754944e-38, %v272
    %v274 = vsel %vm271, %v273, %v269
    %v275 = vmul.f32 1.0, %v274
    %276 = vst [vmem:[#allocation2] sm:$0xff] %v275
    // Predicated region
    $region42: #{tpu_custom_call.1} parent=1 // pred_check
      _
    $region43: #{tpu_custom_call.1} parent=1 // pred_check_branch
      %278 = sbr.rel (0) target = $region45
    $region44: #{tpu_custom_call.1} parent=1 // pred_region
      %280 = vsyncadd [#allocation3], 0
      %s282 = sshll.u32 [#allocation2], 4
      %s283 = int_to_ptr.vmem [resolvable:$true] %s282
      %s284 = sshll.u32 %s10, 4
      %s285 = int_to_ptr.hbm [resolvable:$true] %s284
      %287 = dma.vmem_to_hbm [thread:$0]  %s283, 128, %s285, [#allocation3]
    $region45: #{tpu_custom_call.1} parent=1 // pred_fallthru
      _
    // Predicated region
    $region46: #{tpu_custom_call.1} parent=1 // pred_check
      _
    $region47: #{tpu_custom_call.1} parent=1 // pred_check_branch
      %289 = sbr.rel (0) target = $region49
    $region48: #{tpu_custom_call.1} parent=1 // pred_region
      %291 = dma.done [#allocation3], 128
    $region49: #{tpu_custom_call.1} parent=1 // pred_fallthru
      _
    %292 = vsyncpa [#allocation3], 1

</llo_original>
